<compile_context>
chip_gen: v6e
topology: v6e:2x2x1
jax: 0.10.0
libtpu: 0.0.40
codegen_flags: <defaults>
</compile_context>

<pallas_src>
import jax
import jax.numpy as jnp
from jax import lax
from jax.experimental import pallas as pl
from jax.experimental.pallas import tpu as pltpu

LN_EPS = 1e-5  # torch.nn.LayerNorm default


def _round_up(x, m):
    return (x + m - 1) // m * m


def _vmem_capacity_bytes():
    """Per-TensorCore VMEM capacity; conservative fallback if the query fails."""
    try:
        cap = int(getattr(pltpu.get_tpu_info(), "vmem_capacity_bytes", 0))
        if cap > 0:
            return cap
    except Exception:  # hardware-info query only; never masks kernel errors
        pass
    return 64 << 20  # conservative: v7x per-TC VMEM


def _supports_buffered_one():
    """Narrow feature check for pipeline_mode=pl.Buffered(1) on BlockSpec."""
    if not hasattr(pl, "Buffered"):
        return False
    try:
        pl.BlockSpec((8, 128), lambda i: (0, 0), pipeline_mode=pl.Buffered(1))
    except TypeError:
        return False
    return True


_BUFFERED_ONE = _supports_buffered_one()


def _const_spec(shape, index_map):
    """BlockSpec for a grid-invariant operand; single-buffered when supported."""
    if _BUFFERED_ONE:
        return pl.BlockSpec(shape, index_map, pipeline_mode=pl.Buffered(1))
    return pl.BlockSpec(shape, index_map)


def _make_kernels(d_true, d_pad, nk, use_bf16_matmul):
    """Kernel factory closing over static feature-dim / K-step constants."""
    inv_d = 1.0 / float(d_true)
    pad_cols = d_pad - d_true

    def _mxu(x):
        # Optional bf16 cast for the MXU only; residual/LN math stays f32.
        if use_bf16_matmul and x.dtype == jnp.float32:
            return x.astype(jnp.bfloat16)
        return x

    def _ln_epilogue(y, gamma_ref, beta_ref, o_ref):
        # y: (br, D_pad) f32. Padded columns of y are exactly zero (zero-padded
        # q / W / b), so mean over D_pad * (1/D_true) is already correct and the
        # variance only needs a scalar correction (cent == -mean there).
        mean = jnp.sum(y, axis=-1, keepdims=True) * inv_d
        cent = y - mean
        sq = jnp.sum(cent * cent, axis=-1, keepdims=True)
        if pad_cols:
            sq = sq - float(pad_cols) * (mean * mean)
        var = sq * inv_d
        norm = cent * lax.rsqrt(var + LN_EPS)
        out = (norm * gamma_ref[...].astype(jnp.float32)
               + beta_ref[...].astype(jnp.float32))
        o_ref[...] = out.astype(o_ref.dtype)

    def kernel_resident(q_ref, w_ref, b_ref, g_ref, beta_ref, o_ref):
        # Weight fully resident in VMEM; single grid axis over row tiles.
        q = q_ref[...]
        sub = jnp.dot(_mxu(q), _mxu(w_ref[...]),
                      preferred_element_type=jnp.float32)
        y = q.astype(jnp.float32) + sub + b_ref[...].astype(jnp.float32)
        _ln_epilogue(y, g_ref, beta_ref, o_ref)

    def kernel_ktiled(qk_ref, w_ref, qfull_ref, b_ref, g_ref, beta_ref,
                      o_ref, acc_ref):
        # Weight streamed in (tk, D_pad) blocks along the (last, "arbitrary")
        # reduction axis; f32 accumulator scratch persists across K steps.
        k = pl.program_id(1)

        @pl.when(k == 0)
        def _init():
            acc_ref[...] = jnp.zeros_like(acc_ref)

        acc_ref[...] += jnp.dot(_mxu(qk_ref[...]), _mxu(w_ref[...]),
                                preferred_element_type=jnp.float32)

        @pl.when(k == nk - 1)
        def _finalize():
            y = (qfull_ref[...].astype(jnp.float32) + acc_ref[...]
                 + b_ref[...].astype(jnp.float32))
            _ln_epilogue(y, g_ref, beta_ref, o_ref)

    return kernel_resident, kernel_ktiled


def residual_forward(q, w, b, gamma, beta, *, block_rows=None,
                     use_bf16_matmul=False, force_tk=None):
    """q: (B, S, D). Returns LayerNorm(q + (q @ w + b)) over the last axis."""
    B, S, D = q.shape
    R = B * S
    itemsize = jnp.dtype(q.dtype).itemsize
    w_itemsize = jnp.dtype(w.dtype).itemsize
    sublane = max(8, 32 // itemsize)          # 8 / 16 / 32 rows for 32/16/8-bit

    D_pad = _round_up(D, 128)                 # lane-dense last dim
    # TODO(synk): round D_pad to 256 on v6e/v7x to fill the 2x256^2 MXU when the
    # extra column padding is worth it.

    vmem_cap = _vmem_capacity_bytes()
    budget = max(vmem_cap - (8 << 20), 16 << 20)   # leave headroom for Mosaic

    if block_rows is None:
        # 128 MiB VMEM generations (v5e/v6e) afford larger row tiles than v7x.
        block_rows = 512 if vmem_cap >= (100 << 20) else 256

    # ---- choose the weight strategy: resident vs K-tiled ---------------------
    w_resident = D_pad * D_pad * w_itemsize

    def _largest_fitting(mult):
        t = (D_pad // mult) * mult
        while t >= mult:
            if D_pad % t == 0 and 2 * t * D_pad * w_itemsize <= budget // 3:
                return t
            t -= mult
        return None

    if force_tk is not None:
        assert force_tk % 128 == 0 and D_pad % force_tk == 0
        tk = force_tk
    elif w_resident <= budget // 3:
        tk = D_pad                                   # weight stays resident
    else:
        # Prefer 256-aligned contraction tiles (v6e/v7x MXU), fall back to 128.
        tk = _largest_fitting(256) or _largest_fitting(128) or 128
    nk = D_pad // tk

    # ---- choose the row tile from the remaining VMEM budget ------------------
    if nk == 1:
        w_mult = 1 if _BUFFERED_ONE else 2           # Buffered(1) => one W copy
        fixed = w_resident * w_mult
        per_row = (2 * D_pad * itemsize              # q tiles (double-buffered)
                   + 2 * D_pad * itemsize            # output tiles
                   + 4 * D_pad * 4)                  # f32 temporaries (sub/y/cent/norm)
    else:
        fixed = 2 * tk * D_pad * w_itemsize          # double-buffered W K-blocks
        per_row = (2 * tk * itemsize                 # q K-slice tiles
                   + 2 * D_pad * itemsize            # q full-row tiles (residual)
                   + 2 * D_pad * itemsize            # output tiles
                   + D_pad * 4                       # f32 accumulator scratch
                   + 3 * D_pad * 4)                  # f32 temporaries
    rows_fit = max((budget - fixed) // per_row, sublane)
    br = min(block_rows, rows_fit, _round_up(R, sublane))
    br = max((br // sublane) * sublane, sublane)

    n_row_blocks = pl.cdiv(R, br)                    # partial last block is masked

    # ---- prepare operands (column padding only when D % 128 != 0) ------------
    q2 = q.reshape(R, D)
    if D_pad != D:
        pad = D_pad - D
        q2 = jnp.pad(q2, ((0, 0), (0, pad)))
        w_p = jnp.pad(w, ((0, pad), (0, pad)))
        b_p = jnp.pad(b, (0, pad))
        g_p = jnp.pad(gamma, (0, pad))
        bt_p = jnp.pad(beta, (0, pad))
    else:
        w_p, b_p, g_p, bt_p = w, b, gamma, beta
    b_p = b_p.reshape(1, D_pad)
    g_p = g_p.reshape(1, D_pad)
    bt_p = bt_p.reshape(1, D_pad)

    # ---- VMEM limit (clamped below physical capacity) ------------------------
    vmem_need = fixed + br * per_row + 16 * D_pad * 4
    vmem_limit = int(min(max(vmem_need + (4 << 20), 24 << 20),
                         vmem_cap - (2 << 20)))

    # ---- cost estimate (incl. output write + parameter reads) ----------------
    w_reads = 1 if nk == 1 else int(n_row_blocks)    # K-tiled W is re-streamed per row block
    q_reads = 1 if nk == 1 else 2                    # q also read full-row for the residual
    bytes_accessed = (q_reads * R * D_pad * itemsize
                      + w_reads * D_pad * D_pad * w_itemsize
                      + R * D_pad * itemsize         # output write
                      + 3 * D_pad * 4 + D_pad * w_itemsize)
    cost = pl.CostEstimate(
        flops=int(2 * R * D_pad * D_pad + 10 * R * D_pad),
        transcendentals=int(R),
        bytes_accessed=int(bytes_accessed),
    )

    kernel_resident, kernel_ktiled = _make_kernels(D, D_pad, nk, use_bf16_matmul)

    if nk == 1:
        kernel = kernel_resident
        grid = (n_row_blocks,)
        in_specs = [
            pl.BlockSpec((br, D_pad), lambda i: (i, 0)),       # q row tile
            _const_spec((D_pad, D_pad), lambda i: (0, 0)),     # resident weight
            _const_spec((1, D_pad), lambda i: (0, 0)),         # bias
            _const_spec((1, D_pad), lambda i: (0, 0)),         # LN gamma
            _const_spec((1, D_pad), lambda i: (0, 0)),         # LN beta
        ]
        out_specs = pl.BlockSpec((br, D_pad), lambda i: (i, 0))
        scratch = []
        operands = (q2, w_p, b_p, g_p, bt_p)
        dims = ("parallel",)
    else:
        kernel = kernel_ktiled
        grid = (n_row_blocks, nk)                              # reduction axis last
        in_specs = [
            pl.BlockSpec((br, tk), lambda i, k: (i, k)),       # q K-slice
            pl.BlockSpec((tk, D_pad), lambda i, k: (k, 0)),    # streamed W K-block
            pl.BlockSpec((br, D_pad), lambda i, k: (i, 0)),    # q full row (residual)
            _const_spec((1, D_pad), lambda i, k: (0, 0)),      # bias
            _const_spec((1, D_pad), lambda i, k: (0, 0)),      # LN gamma
            _const_spec((1, D_pad), lambda i, k: (0, 0)),      # LN beta
        ]
        out_specs = pl.BlockSpec((br, D_pad), lambda i, k: (i, 0))
        scratch = [pltpu.VMEM((br, D_pad), jnp.float32)]
        operands = (q2, w_p, q2, b_p, g_p, bt_p)
        dims = ("parallel", "arbitrary")

    out = pl.pallas_call(
        kernel,
        out_shape=jax.ShapeDtypeStruct((R, D_pad), q.dtype),
        grid_spec=pltpu.PrefetchScalarGridSpec(
            num_scalar_prefetch=0,
            grid=grid,
            in_specs=in_specs,
            out_specs=out_specs,
            scratch_shapes=scratch,
        ),
        compiler_params=pltpu.CompilerParams(
            dimension_semantics=dims,
            vmem_limit_bytes=vmem_limit,
        ),
        cost_estimate=cost,
    )(*operands)

    if D_pad != D:
        out = out[:, :D]
    return out.reshape(B, S, D)


def _reference(q, w, b, gamma, beta):
    # plain-JAX reference for correctness check (full-precision matmul)
    y = q + (jnp.einsum("bsd,de->bse", q, w,
                        precision=lax.Precision.HIGHEST) + b)
    mean = jnp.mean(y, axis=-1, keepdims=True)
    var = jnp.mean((y - mean) ** 2, axis=-1, keepdims=True)
    return (y - mean) * lax.rsqrt(var + LN_EPS) * gamma + beta


if __name__ == "__main__":
    B, S, D = 2, 8, 32
    key = jax.random.PRNGKey(0)
    kq, kw, kb = jax.random.split(key, 3)

    q = jax.random.normal(kq, (B, S, D), dtype=jnp.float32)

    # Deterministic parameter init (Linear sublayer + LayerNorm affine params).
    w = jax.random.normal(kw, (D, D), dtype=jnp.float32) * (1.0 / jnp.sqrt(D))
    b = jax.random.normal(kb, (D,), dtype=jnp.float32) * 0.01
    gamma = jnp.ones((D,), dtype=jnp.float32)   # torch LayerNorm init
    beta = jnp.zeros((D,), dtype=jnp.float32)

    out = jax.block_until_ready(residual_forward(q, w, b, gamma, beta))
    ref = _reference(q, w, b, gamma, beta)
    assert out.shape == (B, S, D)
    assert jnp.allclose(out, ref, atol=1e-4, rtol=1e-4), "mismatch vs reference"

    # Ragged batch*seq: exercises the masked partial last row block (no padding).
    q_odd = jax.random.normal(jax.random.PRNGKey(1), (3, 5, D), dtype=jnp.float32)
    out_odd = jax.block_until_ready(residual_forward(q_odd, w, b, gamma, beta))
    ref_odd = _reference(q_odd, w, b, gamma, beta)
    assert jnp.allclose(out_odd, ref_odd, atol=1e-4, rtol=1e-4), "mismatch (ragged rows)"

    # K-tiled weight path (reduction grid axis + accumulator) exercised at small
    # scale by forcing a 128-wide K tile on a 256-wide feature dim.
    D2 = 256
    k2q, k2w, k2b = jax.random.split(jax.random.PRNGKey(2), 3)
    q2 = jax.random.normal(k2q, (2, 8, D2), dtype=jnp.float32)
    w2 = jax.random.normal(k2w, (D2, D2), dtype=jnp.float32) * (1.0 / jnp.sqrt(D2))
    b2 = jax.random.normal(k2b, (D2,), dtype=jnp.float32) * 0.01
    g2 = jnp.ones((D2,), dtype=jnp.float32)
    bt2 = jnp.zeros((D2,), dtype=jnp.float32)
    out_kt = jax.block_until_ready(
        residual_forward(q2, w2, b2, g2, bt2, force_tk=128))
    ref_kt = _reference(q2, w2, b2, g2, bt2)
    # Slightly looser tolerance: longer f32 contraction accumulated in two K steps.
    assert jnp.allclose(out_kt, ref_kt, atol=1e-3, rtol=1e-3), "mismatch (K-tiled path)"

    print("KERNEL_OK")
</pallas_src>

<mosaic_0001>
module attributes {stable_mosaic.version = 11 : i64} {
  func.func @kernel_resident(%arg0: i32, %arg1: memref<16x128xf32, #tpu.memory_space<vmem>>, %arg2: memref<128x128xf32, #tpu.memory_space<vmem>>, %arg3: memref<1x128xf32, #tpu.memory_space<vmem>>, %arg4: memref<1x128xf32, #tpu.memory_space<vmem>>, %arg5: memref<1x128xf32, #tpu.memory_space<vmem>>, %arg6: memref<16x128xf32, #tpu.memory_space<vmem>>) attributes {dimension_semantics = [#tpu.dimension_semantics<parallel>], iteration_bounds = array<i64: 1>, scalar_prefetch = 0 : i64, scratch_operands = 0 : i64, tpu.core_type = #tpu.core_type<tc>, window_params = [{transform_indices = @transform_0, window_bounds = array<i64: 16, 128>}, {pipeline_mode = #tpu.pipeline_mode<synchronous>, transform_indices = @transform_1, window_bounds = array<i64: 128, 128>}, {pipeline_mode = #tpu.pipeline_mode<synchronous>, transform_indices = @transform_2, window_bounds = array<i64: 1, 128>}, {pipeline_mode = #tpu.pipeline_mode<synchronous>, transform_indices = @transform_3, window_bounds = array<i64: 1, 128>}, {pipeline_mode = #tpu.pipeline_mode<synchronous>, transform_indices = @transform_4, window_bounds = array<i64: 1, 128>}, {transform_indices = @transform_5, window_bounds = array<i64: 16, 128>}]} {
    %c0 = arith.constant 0 : index
    %c0_0 = arith.constant 0 : index
    %0 = vector.load %arg1[%c0, %c0_0] : memref<16x128xf32, #tpu.memory_space<vmem>>, vector<16x128xf32>
    %c0_1 = arith.constant 0 : index
    %c0_2 = arith.constant 0 : index
    %1 = vector.load %arg2[%c0_1, %c0_2] : memref<128x128xf32, #tpu.memory_space<vmem>>, vector<128x128xf32>
    %cst = arith.constant dense<0.000000e+00> : vector<16x128xf32>
    %2 = tpu.matmul %0, %1, %cst {dimension_numbers = #tpu.dot_dimension_numbers<[1], [0], [0], [1], [0, 0, 1, 1], [], []>} : vector<16x128xf32>, vector<128x128xf32>, vector<16x128xf32> -> vector<16x128xf32>
    %3 = arith.addf %0, %2 : vector<16x128xf32>
    %c0_3 = arith.constant 0 : index
    %c0_4 = arith.constant 0 : index
    %4 = vector.load %arg3[%c0_3, %c0_4] : memref<1x128xf32, #tpu.memory_space<vmem>>, vector<1x128xf32>
    %5 = vector.broadcast %4 : vector<1x128xf32> to vector<16x128xf32>
    %6 = arith.addf %3, %5 : vector<16x128xf32>
    %cst_5 = arith.constant dense<0.000000e+00> : vector<16xf32>
    %7 = vector.multi_reduction <add>, %6, %cst_5 [1] : vector<16x128xf32> to vector<16xf32>
    %8 = vector.shape_cast %7 : vector<16xf32> to vector<16x1xf32>
    %cst_6 = arith.constant 3.125000e-02 : f32
    %9 = vector.broadcast %cst_6 : f32 to vector<16x1xf32>
    %10 = arith.mulf %8, %9 : vector<16x1xf32>
    %11 = vector.broadcast %10 : vector<16x1xf32> to vector<16x128xf32>
    %12 = arith.subf %6, %11 : vector<16x128xf32>
    %13 = arith.mulf %12, %12 : vector<16x128xf32>
    %cst_7 = arith.constant dense<0.000000e+00> : vector<16xf32>
    %14 = vector.multi_reduction <add>, %13, %cst_7 [1] : vector<16x128xf32> to vector<16xf32>
    %15 = vector.shape_cast %14 : vector<16xf32> to vector<16x1xf32>
    %16 = arith.mulf %10, %10 : vector<16x1xf32>
    %cst_8 = arith.constant 9.600000e+01 : f32
    %17 = vector.broadcast %cst_8 : f32 to vector<16x1xf32>
    %18 = arith.mulf %17, %16 : vector<16x1xf32>
    %19 = arith.subf %15, %18 : vector<16x1xf32>
    %cst_9 = arith.constant 3.125000e-02 : f32
    %20 = vector.broadcast %cst_9 : f32 to vector<16x1xf32>
    %21 = arith.mulf %19, %20 : vector<16x1xf32>
    %cst_10 = arith.constant 9.99999974E-6 : f32
    %22 = vector.broadcast %cst_10 : f32 to vector<16x1xf32>
    %23 = arith.addf %21, %22 : vector<16x1xf32>
    %24 = math.rsqrt %23 : vector<16x1xf32>
    %25 = vector.broadcast %24 : vector<16x1xf32> to vector<16x128xf32>
    %26 = arith.mulf %12, %25 : vector<16x128xf32>
    %c0_11 = arith.constant 0 : index
    %c0_12 = arith.constant 0 : index
    %27 = vector.load %arg4[%c0_11, %c0_12] : memref<1x128xf32, #tpu.memory_space<vmem>>, vector<1x128xf32>
    %28 = vector.broadcast %27 : vector<1x128xf32> to vector<16x128xf32>
    %29 = arith.mulf %26, %28 : vector<16x128xf32>
    %c0_13 = arith.constant 0 : index
    %c0_14 = arith.constant 0 : index
    %30 = vector.load %arg5[%c0_13, %c0_14] : memref<1x128xf32, #tpu.memory_space<vmem>>, vector<1x128xf32>
    %31 = vector.broadcast %30 : vector<1x128xf32> to vector<16x128xf32>
    %32 = arith.addf %29, %31 : vector<16x128xf32>
    %c0_15 = arith.constant 0 : index
    %c0_16 = arith.constant 0 : index
    %33 = vector.load %arg6[%c0_15, %c0_16] : memref<16x128xf32, #tpu.memory_space<vmem>>, vector<16x128xf32>
    tpu.vector_store %arg6[%c0_15, %c0_16], %32 {strides = array<i32>} : memref<16x128xf32, #tpu.memory_space<vmem>>, vector<16x128xf32>,
    return
  }
  func.func @transform_0(%arg0: i32) -> (i32, i32) {
    %c0_i32 = arith.constant 0 : i32
    %c0_i32_0 = arith.constant 0 : i32
    return %arg0, %c0_i32 : i32, i32
  }
  func.func @transform_1(%arg0: i32) -> (i32, i32) {
    %c0_i32 = arith.constant 0 : i32
    %c0_i32_0 = arith.constant 0 : i32
    %c0_i32_1 = arith.constant 0 : i32
    return %c0_i32, %c0_i32_0 : i32, i32
  }
  func.func @transform_2(%arg0: i32) -> (i32, i32) {
    %c0_i32 = arith.constant 0 : i32
    %c0_i32_0 = arith.constant 0 : i32
    %c0_i32_1 = arith.constant 0 : i32
    return %c0_i32, %c0_i32_0 : i32, i32
  }
  func.func @transform_3(%arg0: i32) -> (i32, i32) {
    %c0_i32 = arith.constant 0 : i32
    %c0_i32_0 = arith.constant 0 : i32
    %c0_i32_1 = arith.constant 0 : i32
    return %c0_i32, %c0_i32_0 : i32, i32
  }
  func.func @transform_4(%arg0: i32) -> (i32, i32) {
    %c0_i32 = arith.constant 0 : i32
    %c0_i32_0 = arith.constant 0 : i32
    %c0_i32_1 = arith.constant 0 : i32
    return %c0_i32, %c0_i32_0 : i32, i32
  }
  func.func @transform_5(%arg0: i32) -> (i32, i32) {
    %c0_i32 = arith.constant 0 : i32
    %c0_i32_0 = arith.constant 0 : i32
    return %arg0, %c0_i32 : i32, i32
  }
}

</mosaic_0001>

<llo_original>
// kernel: tpu_custom_call.1
$region0: #{tpu_custom_call.1}
  #allocation0 [shape = 'u32[]', space=smem, size = 0x4, offset = 0x4, fixed_abs, tag = 'smem constant byte address 0x4 - core index']
  #allocation1 [shape = 'u32[144,128]{1,0:T(1,128)}', space=vmem, size = 0x12000, scoped, tag = 'internal scratch']
  %s0 = inlined_call_operand.hbm [shape: f32[16,128], index: 0, kind: input, shape index: {}]
  %s1 = inlined_call_operand.hbm [shape: f32[128,128], index: 1, kind: input, shape index: {}]
  %s2 = inlined_call_operand.vmem [shape: f32[1,128], index: 2, kind: input, shape index: {}]
  %s3 = inlined_call_operand.vmem [shape: f32[1,128], index: 3, kind: input, shape index: {}]
  %s4 = inlined_call_operand.vmem [shape: f32[1,128], index: 4, kind: input, shape index: {}]
  %s5 = inlined_call_operand.hbm [shape: f32[16,128], index: 5, kind: output, shape index: {}]
  %s6 = sld [smem:[#allocation0]]
  $region38: #{tpu_custom_call.1} parent=0
    _
  %s8 = ssub.s32 1, %s6
  %s9 = scalar_select 0, %s8, %s6
  $region1: #{tpu_custom_call.1} parent=0
    #allocation2 [shape = 'u8[8192]{0}', space=vmem, size = 0x2000, scoped, tag = 'input window, operand 0, single buffered']
    #allocation3 [shape = 's32[1]{0}', space=sflag, size = 0x4, scoped, tag = 'scoped memory for tpu_custom_call.1']
    #allocation4 [shape = 's32[1]{0}', space=sflag, size = 0x4, scoped, tag = 'scoped memory for tpu_custom_call.1']
    #allocation5 [shape = 'u8[65536]{0}', space=vmem, size = 0x10000, scoped, tag = 'input window, operand 1, single buffered']
    #allocation6 [shape = 's32[1]{0}', space=sflag, size = 0x4, scoped, tag = 'scoped memory for tpu_custom_call.1']
    #allocation7 [shape = 'u8[8192]{0}', space=vmem, size = 0x2000, scoped, tag = 'output window, operand 0, single buffered']
    %10 = vsyncpa [#allocation3], 0
    %11 = vsyncpa [#allocation6], 0
    %12 = vsyncpa [#allocation4], 0
    // Predicated region
    $region2: #{tpu_custom_call.1} parent=1 // pred_check
      _
    $region3: #{tpu_custom_call.1} parent=1 // pred_check_branch
      %14 = sbr.rel (0) target = $region5
    $region4: #{tpu_custom_call.1} parent=1 // pred_region
      %s16 = ssub.s32 256, 256
      %17 = vsyncadd [#allocation3], %s16
      %s18 = sshll.u32 [#allocation2], 4
      %s19 = int_to_ptr.vmem [resolvable:$true] %s18
      %24 = dma.hbm_to_vmem [thread:$0]  %s0, 256, %s19, [#allocation3], 128, 128, 8
    $region5: #{tpu_custom_call.1} parent=1 // pred_fallthru
      _
    // Predicated region
    $region6: #{tpu_custom_call.1} parent=1 // pred_check
      _
    $region7: #{tpu_custom_call.1} parent=1 // pred_check_branch
      %26 = sbr.rel (0) target = $region9
    $region8: #{tpu_custom_call.1} parent=1 // pred_region
      %s28 = ssub.s32 2048, 2048
      %29 = vsyncadd [#allocation6], %s28
      %s30 = sshll.u32 [#allocation5], 4
      %s31 = int_to_ptr.vmem [resolvable:$true] %s30
      %36 = dma.hbm_to_vmem [thread:$0]  %s1, 2048, %s31, [#allocation6], 128, 128, 8
    $region9: #{tpu_custom_call.1} parent=1 // pred_fallthru
      _
    // Predicated region
    $region10: #{tpu_custom_call.1} parent=1 // pred_check
      _
    $region11: #{tpu_custom_call.1} parent=1 // pred_check_branch
      %38 = sbr.rel (0) target = $region13
    $region12: #{tpu_custom_call.1} parent=1 // pred_region
      _
    $region13: #{tpu_custom_call.1} parent=1 // pred_fallthru
      _
    // Predicated region
    $region14: #{tpu_custom_call.1} parent=1 // pred_check
      _
    $region15: #{tpu_custom_call.1} parent=1 // pred_check_branch
      %40 = sbr.rel (0) target = $region17
    $region16: #{tpu_custom_call.1} parent=1 // pred_region
      _
    $region17: #{tpu_custom_call.1} parent=1 // pred_fallthru
      _
    // Predicated region
    $region18: #{tpu_custom_call.1} parent=1 // pred_check
      _
    $region19: #{tpu_custom_call.1} parent=1 // pred_check_branch
      %42 = sbr.rel (0) target = $region21
    $region20: #{tpu_custom_call.1} parent=1 // pred_region
      _
    $region21: #{tpu_custom_call.1} parent=1 // pred_fallthru
      _
    // Predicated region
    $region22: #{tpu_custom_call.1} parent=1 // pred_check
      _
    $region23: #{tpu_custom_call.1} parent=1 // pred_check_branch
      %44 = sbr.rel (0) target = $region25
    $region24: #{tpu_custom_call.1} parent=1 // pred_region
      %45 = dma.done [#allocation3], 256
    $region25: #{tpu_custom_call.1} parent=1 // pred_fallthru
      _
    // Predicated region
    $region26: #{tpu_custom_call.1} parent=1 // pred_check
      _
    $region27: #{tpu_custom_call.1} parent=1 // pred_check_branch
      %47 = sbr.rel (0) target = $region29
    $region28: #{tpu_custom_call.1} parent=1 // pred_region
      %48 = dma.done [#allocation6], 2048
    $region29: #{tpu_custom_call.1} parent=1 // pred_fallthru
      _
    %v49 = vld [vmem:[#allocation2] sm:$0xff]
    %v50 = vld [vmem:[#allocation2 + $0x8] sm:$0xff]
    %v51 = vld [vmem:[#allocation5] sm:$0xff]
    %v52 = vld [vmem:[#allocation5 + $0x8] sm:$0xff]
    %v53 = vld [vmem:[#allocation5 + $0x10] sm:$0xff]
    %v54 = vld [vmem:[#allocation5 + $0x18] sm:$0xff]
    %v55 = vld [vmem:[#allocation5 + $0x20] sm:$0xff]
    %v56 = vld [vmem:[#allocation5 + $0x28] sm:$0xff]
    %v57 = vld [vmem:[#allocation5 + $0x30] sm:$0xff]
    %v58 = vld [vmem:[#allocation5 + $0x38] sm:$0xff]
    %v59 = vld [vmem:[#allocation5 + $0x40] sm:$0xff]
    %v60 = vld [vmem:[#allocation5 + $0x48] sm:$0xff]
    %v61 = vld [vmem:[#allocation5 + $0x50] sm:$0xff]
    %v62 = vld [vmem:[#allocation5 + $0x58] sm:$0xff]
    %v63 = vld [vmem:[#allocation5 + $0x60] sm:$0xff]
    %v64 = vld [vmem:[#allocation5 + $0x68] sm:$0xff]
    %v65 = vld [vmem:[#allocation5 + $0x70] sm:$0xff]
    %v66 = vld [vmem:[#allocation5 + $0x78] sm:$0xff]
    %67 = vmatprep.subr.mxu0 0.0
    %68 = vmatpush1.msra.mxu0 %v66
    %69 = vmatprep.subr.mxu0 0.0
    %70 = vmatpush1.msra.mxu0 %v65
    %71 = vmatprep.subr.mxu0 0.0
    %72 = vmatpush1.msra.mxu0 %v64
    %73 = vmatprep.subr.mxu0 0.0
    %74 = vmatpush1.msra.mxu0 %v63
    %75 = vmatprep.subr.mxu0 0.0
    %76 = vmatpush1.msra.mxu0 %v62
    %77 = vmatprep.subr.mxu0 0.0
    %78 = vmatpush1.msra.mxu0 %v61
    %79 = vmatprep.subr.mxu0 0.0
    %80 = vmatpush1.msra.mxu0 %v60
    %81 = vmatprep.subr.mxu0 0.0
    %82 = vmatpush1.msra.mxu0 %v59
    %83 = vmatprep.subr.mxu0 0.0
    %84 = vmatpush1.msra.mxu0 %v58
    %85 = vmatprep.subr.mxu0 0.0
    %86 = vmatpush1.msra.mxu0 %v57
    %87 = vmatprep.subr.mxu0 0.0
    %88 = vmatpush1.msra.mxu0 %v56
    %89 = vmatprep.subr.mxu0 0.0
    %90 = vmatpush1.msra.mxu0 %v55
    %91 = vmatprep.subr.mxu0 0.0
    %92 = vmatpush1.msra.mxu0 %v54
    %93 = vmatprep.subr.mxu0 0.0
    %94 = vmatpush1.msra.mxu0 %v53
    %95 = vmatprep.subr.mxu0 0.0
    %96 = vmatpush1.msra.mxu0 %v52
    %97 = vmatprep.subr.mxu0 0.0
    %98 = vmatpush1.msra.mxu0 %v51
    %99 = vmatprep.subr.mxu0 0.0
    %100 = vmatpush2.msra.mxu0 0.0
    %101 = vmatprep.subr.mxu0 0.0
    %102 = vmatpush2.msra.mxu0 0.0
    %103 = vmatprep.subr.mxu0 0.0
    %104 = vmatpush2.msra.mxu0 0.0
    %105 = vmatprep.subr.mxu0 0.0
    %106 = vmatpush2.msra.mxu0 0.0
    %107 = vmatprep.subr.mxu0 0.0
    %108 = vmatpush2.msra.mxu0 0.0
    %109 = vmatprep.subr.mxu0 0.0
    %110 = vmatpush2.msra.mxu0 0.0
    %111 = vmatprep.subr.mxu0 0.0
    %112 = vmatpush2.msra.mxu0 0.0
    %113 = vmatprep.subr.mxu0 0.0
    %114 = vmatpush2.msra.mxu0 0.0
    %115 = vmatprep.subr.mxu0 0.0
    %116 = vmatpush2.msra.mxu0 0.0
    %117 = vmatprep.subr.mxu0 0.0
    %118 = vmatpush2.msra.mxu0 0.0
    %119 = vmatprep.subr.mxu0 0.0
    %120 = vmatpush2.msra.mxu0 0.0
    %121 = vmatprep.subr.mxu0 0.0
    %122 = vmatpush2.msra.mxu0 0.0
    %123 = vmatprep.subr.mxu0 0.0
    %124 = vmatpush2.msra.mxu0 0.0
    %125 = vmatprep.subr.mxu0 0.0
    %126 = vmatpush2.msra.mxu0 0.0
    %127 = vmatprep.subr.mxu0 0.0
    %128 = vmatpush2.msra.mxu0 0.0
    %129 = vmatprep.subr.mxu0 0.0
    %130 = vmatpush2.msra.mxu0 0.0
    %131 = vmatprep.mubr.f32.mxu0 0.0
    %132 = vmatmul.mubr.f32.gmra.mxu0 %v49
    %v133 = vpop.f32.mrf.mxu0
    %v134 = vadd.f32 0.0, %v133
    %v135 = vpop.f32.mrf.mxu0
    %136 = vmatprep.mubr.f32.mxu0 0.0
    %137 = vmatmul.mubr.f32.gmra.mxu0 %v50
    %v138 = vpop.f32.mrf.mxu0
    %v139 = vadd.f32 0.0, %v138
    %v140 = vpop.f32.mrf.mxu0
    %141 = vdwg.mxu0
    %v142 = vadd.f32 %v49, %v134
    %v143 = vadd.f32 %v50, %v139
    %v144 = vld [vmem:[%s2] sm:$0x1]
    %v146 = vlaneseq
    %v147 = vshrl.u32 %v146, 7
    %v148 = vsub.s32 0, %v147
    %v149 = vrot.slane %v144, %v148
    %v151 = vadd.f32 %v142, %v149
    %v152 = vadd.f32 %v143, %v149
    %153 = vadd.xlane.f32.xlu0 %v151
    %v154 = vpop.xlane.xlu0 %153
    %155 = vadd.xlane.f32.xlu0 %v152
    %v156 = vpop.xlane.xlu0 %155
    %v157 = vmul.f32 %v154, 0.03125
    %v158 = vmul.f32 %v156, 0.03125
    %v159 = vsub.f32 %v151, %v157
    %v160 = vsub.f32 %v152, %v158
    %v161 = vmul.f32 %v159, %v159
    %v162 = vmul.f32 %v160, %v160
    %163 = vadd.xlane.f32.xlu0 %v161
    %v164 = vpop.xlane.xlu0 %163
    %165 = vadd.xlane.f32.xlu0 %v162
    %v166 = vpop.xlane.xlu0 %165
    %v167 = vmul.f32 %v157, %v157
    %v168 = vmul.f32 %v158, %v158
    %v169 = vmul.f32 %v167, 96.0
    %v170 = vmul.f32 %v168, 96.0
    %v171 = vsub.f32 %v164, %v169
    %v172 = vsub.f32 %v166, %v170
    %v173 = vmul.f32 %v171, 0.03125
    %v174 = vmul.f32 %v172, 0.03125
    %v175 = vadd.f32 %v173, 1e-05
    %v176 = vadd.f32 %v174, 1e-05
    %v177 = vrsqrt.pop %v175
    %v178 = vrsqrt.pop %v176
    %v179 = vmul.f32 %v159, %v177
    %v180 = vmul.f32 %v160, %v178
    %v181 = vld [vmem:[%s3] sm:$0x1]
    %v183 = vlaneseq
    %v184 = vshrl.u32 %v183, 7
    %v185 = vsub.s32 0, %v184
    %v186 = vrot.slane %v181, %v185
    %v188 = vmul.f32 %v179, %v186
    %v189 = vmul.f32 %v180, %v186
    %v190 = vld [vmem:[%s4] sm:$0x1]
    %v192 = vlaneseq
    %v193 = vshrl.u32 %v192, 7
    %v194 = vsub.s32 0, %v193
    %v195 = vrot.slane %v190, %v194
    %v197 = vadd.f32 %v188, %v195
    %v198 = vadd.f32 %v189, %v195
    %199 = vst [vmem:[#allocation7] sm:$0xff] %v197
    %200 = vst [vmem:[#allocation7 + $0x8] sm:$0xff] %v198
    // Predicated region
    $region30: #{tpu_custom_call.1} parent=1 // pred_check
      _
    $region31: #{tpu_custom_call.1} parent=1 // pred_check_branch
      %202 = sbr.rel (0) target = $region33
    $region32: #{tpu_custom_call.1} parent=1 // pred_region
      %s204 = ssub.s32 256, 256
      %205 = vsyncadd [#allocation4], %s204
      %s206 = sshll.u32 [#allocation7], 4
      %s207 = int_to_ptr.vmem [resolvable:$true] %s206
      %212 = dma.vmem_to_hbm [thread:$0]  %s207, 256, %s5, [#allocation4], 128, 128, 8
    $region33: #{tpu_custom_call.1} parent=1 // pred_fallthru
      _
    // Predicated region
    $region34: #{tpu_custom_call.1} parent=1 // pred_check
      _
    $region35: #{tpu_custom_call.1} parent=1 // pred_check_branch
      %214 = sbr.rel (0) target = $region37
    $region36: #{tpu_custom_call.1} parent=1 // pred_region
      %215 = dma.done [#allocation4], 256
    $region37: #{tpu_custom_call.1} parent=1 // pred_fallthru
      _
    %216 = vsyncpa [#allocation3], 1
    %217 = vsyncpa [#allocation6], 1
    %218 = vsyncpa [#allocation4], 1

</llo_original>
